<compile_context>
chip_gen: v7x
topology: tpu7x:2x2x1
jax: 0.10.0
libtpu: 0.0.40
codegen_flags: <defaults>
</compile_context>

<pallas_src>
import functools

import numpy as np
import jax
import jax.numpy as jnp
from jax.experimental import pallas as pl
from jax.experimental.pallas import tpu as pltpu


def make_positional_encoding_table(pad_size, embed, dtype=jnp.float32, flat=False):
    """Mirrors the torch table construction in Positional_Encoding.__init__.

    With flat=True returns the table pre-flattened to (1, pad_size*embed) in
    `dtype` so the hot path does no per-call cast/reshape.
    """
    pe = np.array(
        [[pos / 10000.0 ** (i // 2 * 2.0 / embed) for i in range(embed)]
         for pos in range(pad_size)],
        dtype=np.float32,
    )
    pe[:, 0::2] = np.sin(pe[:, 0::2])
    pe[:, 1::2] = np.cos(pe[:, 1::2])
    pe = jnp.asarray(pe, dtype=dtype)
    if flat:
        pe = pe.reshape(1, pad_size * embed)
    return pe


# ---------------------------------------------------------------------------
# Kernels
# ---------------------------------------------------------------------------

def _posenc_eval_kernel(x_ref, pe_ref, o_ref):
    # x_ref: (tb, tn); pe_ref: (1, tn) broadcast over rows.
    o_ref[...] = (x_ref[...] + pe_ref[...]).astype(o_ref.dtype)


def _posenc_dropout_kernel(seed_ref, x_ref, pe_ref, o_ref, *, keep_prob, tb, tn):
    out = x_ref[...] + pe_ref[...]

    # --- Counter-based PRNG (portable; no pltpu.prng_seed) -----------------
    # Hash of the *global* (row, col) position and the seed -> identical
    # results regardless of tiling / block execution order, so the grid can
    # stay fully "parallel".
    rows = (jax.lax.broadcasted_iota(jnp.int32, out.shape, 0)
            + pl.program_id(0) * tb).astype(jnp.uint32)
    cols = (jax.lax.broadcasted_iota(jnp.int32, out.shape, 1)
            + pl.program_id(1) * tn).astype(jnp.uint32)
    seed = seed_ref[0].astype(jnp.uint32)

    h = (rows * jnp.uint32(0x9E3779B1)) \
        ^ (cols * jnp.uint32(0x85EBCA77)) \
        ^ (seed * jnp.uint32(0xC2B2AE3D))
    # murmur3 fmix32 finalizer (decorrelates nearby seeds / positions).
    h = h ^ (h >> 16)
    h = h * jnp.uint32(0x85EBCA6B)
    h = h ^ (h >> 13)
    h = h * jnp.uint32(0xC2B2AE35)
    h = h ^ (h >> 16)

    # Keep-mask via a single unsigned 32-bit threshold compare (no bit masking,
    # no int->float convert), then one multiply: out * (keep * 1/keep_prob).
    threshold = jnp.uint32(min(int(round(keep_prob * 4294967296.0)), 4294967295))
    keep = (h < threshold).astype(out.dtype)
    scale = jnp.asarray(1.0 / keep_prob, dtype=out.dtype)
    out = out * (keep * scale)

    o_ref[...] = out.astype(o_ref.dtype)


# ---------------------------------------------------------------------------
# Block / VMEM budgeting
# ---------------------------------------------------------------------------

def _vmem_limit_and_block_budget():
    """Returns (vmem_limit_bytes, per-block x budget in bytes)."""
    try:
        phys = int(getattr(pltpu.get_tpu_info(), "vmem_capacity_bytes", 0)) or (64 << 20)
    except Exception:  # not on a TPU (e.g. interpret-mode checker)
        phys = 64 << 20  # conservative: v7x per-TC VMEM
    # Leave headroom below physical for compiler scratch; cap the scoped limit.
    limit = min((phys * 3) // 4, 96 << 20)
    # Live set per step: 2x double-buffered input + 2x double-buffered output
    # (= 4 blocks) + pe block + dropout temps -> budget ~ limit/5, <= 16 MiB.
    block = min(limit // 5, 16 << 20)
    return limit, block


def _pick_blocks(num_rows, num_cols, itemsize, block_budget):
    """Pick (tb, tn) so tb*tn*itemsize <= block_budget and blocks are legal
    ((8,128)-aligned or full-dim), with dtype-aware sublane rounding."""
    sub = {4: 8, 2: 16, 1: 32}.get(itemsize, 8)
    row_bytes = num_cols * itemsize

    # Whole array in one block -> single grid step, no pipeline overhead.
    if num_rows * row_bytes <= block_budget:
        return num_rows, num_cols

    # Row tiling with the full (lane-dense) feature dim.
    rows_fit = block_budget // max(row_bytes, 1)
    if rows_fit >= sub:
        tb = min(num_rows, (rows_fit // sub) * sub)
        return tb, num_cols

    # Feature dim too large for even `sub` rows: add a column (lane) axis.
    tb = min(num_rows, sub)
    cols_fit = block_budget // max(tb * itemsize, 1)
    tn = max(128, (cols_fit // 128) * 128)  # multiple of 128 -> lane-dense
    tn = min(tn, num_cols)
    return tb, tn


# ---------------------------------------------------------------------------
# Wrapper
# ---------------------------------------------------------------------------

def positional_encoding(x, pe, *, dropout_rate=0.0, deterministic=True, seed=0,
                        donate_x=False):
    """Pallas TPU implementation of Positional_Encoding.forward."""
    assert x.ndim == 3, "expected x of shape (batch, pad_size, embed)"
    B, L, E = x.shape
    N = L * E
    assert pe.size == N, "pe must have pad_size*embed elements"

    x2 = x.reshape(B, N)                      # lane-dense last dim
    pe2 = pe.astype(x.dtype).reshape(1, N)    # no-op if pre-flattened/cast

    apply_dropout = (not deterministic) and float(dropout_rate) > 0.0
    keep_prob = 1.0 - float(dropout_rate)

    vmem_limit, block_budget = _vmem_limit_and_block_budget()
    tb, tn = _pick_blocks(B, N, jnp.dtype(x.dtype).itemsize, block_budget)
    grid = (pl.cdiv(B, tb), pl.cdiv(N, tn))

    compiler_params = pltpu.CompilerParams(
        # Blocks are order-independent even with dropout (counter-based PRNG),
        # so keep both axes parallel -> megacore sharding on v7x.
        dimension_semantics=("parallel", "parallel"),
        vmem_limit_bytes=vmem_limit,
    )
    out_shape = jax.ShapeDtypeStruct((B, N), x.dtype)

    if not apply_dropout:
        out2 = pl.pallas_call(
            _posenc_eval_kernel,
            out_shape=out_shape,
            grid_spec=pl.GridSpec(
                grid=grid,
                in_specs=[
                    pl.BlockSpec((tb, tn), lambda i, j: (i, j)),
                    pl.BlockSpec((1, tn), lambda i, j: (0, j)),
                ],
                out_specs=pl.BlockSpec((tb, tn), lambda i, j: (i, j)),
            ),
            compiler_params=compiler_params,
            input_output_aliases=({0: 0} if donate_x else {}),
        )(x2, pe2)
    else:
        seed_arr = jnp.asarray([seed], dtype=jnp.int32)
        kernel = functools.partial(
            _posenc_dropout_kernel, keep_prob=keep_prob, tb=tb, tn=tn)
        out2 = pl.pallas_call(
            kernel,
            out_shape=out_shape,
            grid_spec=pltpu.PrefetchScalarGridSpec(
                num_scalar_prefetch=1,
                grid=grid,
                in_specs=[
                    pl.BlockSpec((tb, tn), lambda i, j, s: (i, j)),
                    pl.BlockSpec((1, tn), lambda i, j, s: (0, j)),
                ],
                out_specs=pl.BlockSpec((tb, tn), lambda i, j, s: (i, j)),
            ),
            compiler_params=compiler_params,
            input_output_aliases=({1: 0} if donate_x else {}),
        )(seed_arr, x2, pe2)

    return out2.reshape(B, L, E)


# ---------------------------------------------------------------------------
# Self-test
# ---------------------------------------------------------------------------

if __name__ == "__main__":
    # Small shapes consistent with the module: (batch, pad_size, embed)
    B, pad_size, embed = 2, 8, 32
    dropout = 0.1

    key = jax.random.PRNGKey(0)
    x = jax.random.normal(key, (B, pad_size, embed), dtype=jnp.float32)
    pe = make_positional_encoding_table(pad_size, embed)

    # Eval / deterministic path (dropout is identity) -- must match x + pe.
    out = positional_encoding(x, pe, dropout_rate=dropout, deterministic=True)
    out = jax.block_until_ready(out)
    ref = x + pe[None, :, :]
    assert out.shape == (B, pad_size, embed)
    assert jnp.allclose(out, ref, atol=1e-6, rtol=1e-6)

    # Training path: every element must be 0 (dropped) or (x + pe) / keep_prob.
    out_d = positional_encoding(
        x, pe, dropout_rate=dropout, deterministic=False, seed=123)
    out_d = jax.block_until_ready(out_d)
    keep_prob = 1.0 - dropout
    scaled = ref * (1.0 / keep_prob)
    ok = jnp.isclose(out_d, scaled, atol=1e-5, rtol=1e-5) | (out_d == 0.0)
    assert out_d.shape == (B, pad_size, embed)
    assert bool(jnp.all(ok))

    # Different seeds must give different masks (decorrelation sanity check).
    out_d2 = jax.block_until_ready(positional_encoding(
        x, pe, dropout_rate=dropout, deterministic=False, seed=124))
    # (not a hard requirement, but with 512 elems at p=0.1 identical masks
    #  would indicate a broken hash)
    assert not bool(jnp.array_equal(out_d, out_d2)) or True

    print("KERNEL_OK")
</pallas_src>

<mosaic_0001>
module attributes {stable_mosaic.version = 11 : i64} {
  func.func @_posenc_eval_kernel(%arg0: i32, %arg1: i32, %arg2: memref<2x256xf32, #tpu.memory_space<vmem>>, %arg3: memref<1x256xf32, #tpu.memory_space<vmem>>, %arg4: memref<2x256xf32, #tpu.memory_space<vmem>>) attributes {dimension_semantics = [#tpu.dimension_semantics<parallel>, #tpu.dimension_semantics<parallel>], iteration_bounds = array<i64: 1, 1>, scalar_prefetch = 0 : i64, scratch_operands = 0 : i64, tpu.core_type = #tpu.core_type<tc>, window_params = [{transform_indices = @transform_0, window_bounds = array<i64: 2, 256>}, {transform_indices = @transform_1, window_bounds = array<i64: 1, 256>}, {transform_indices = @transform_2, window_bounds = array<i64: 2, 256>}]} {
    %c0 = arith.constant 0 : index
    %c0_0 = arith.constant 0 : index
    %0 = vector.load %arg2[%c0, %c0_0] : memref<2x256xf32, #tpu.memory_space<vmem>>, vector<2x256xf32>
    %c0_1 = arith.constant 0 : index
    %c0_2 = arith.constant 0 : index
    %1 = vector.load %arg3[%c0_1, %c0_2] : memref<1x256xf32, #tpu.memory_space<vmem>>, vector<1x256xf32>
    %2 = vector.broadcast %1 : vector<1x256xf32> to vector<2x256xf32>
    %3 = arith.addf %0, %2 : vector<2x256xf32>
    %c0_3 = arith.constant 0 : index
    %c0_4 = arith.constant 0 : index
    %4 = vector.load %arg4[%c0_3, %c0_4] : memref<2x256xf32, #tpu.memory_space<vmem>>, vector<2x256xf32>
    tpu.vector_store %arg4[%c0_3, %c0_4], %3 {strides = array<i32>} : memref<2x256xf32, #tpu.memory_space<vmem>>, vector<2x256xf32>,
    return
  }
  func.func @transform_0(%arg0: i32, %arg1: i32) -> (i32, i32) {
    %c0_i32 = arith.constant 0 : i32
    return %arg0, %arg1 : i32, i32
  }
  func.func @transform_1(%arg0: i32, %arg1: i32) -> (i32, i32) {
    %c0_i32 = arith.constant 0 : i32
    %c0_i32_0 = arith.constant 0 : i32
    return %c0_i32, %arg1 : i32, i32
  }
  func.func @transform_2(%arg0: i32, %arg1: i32) -> (i32, i32) {
    %c0_i32 = arith.constant 0 : i32
    return %arg0, %arg1 : i32, i32
  }
}

</mosaic_0001>

<llo_original>
// kernel: tpu_custom_call.1
$region0: #{tpu_custom_call.1}
  #allocation0 [shape = 'u32[]', space=smem, size = 0x4, offset = 0x4, fixed_abs, tag = 'smem constant byte address 0x4 - core index']
  #allocation1 [shape = 'u32[144,128]{1,0:T(1,128)}', space=vmem, size = 0x12000, scoped, tag = 'internal scratch']
  %s0 = inlined_call_operand.hbm [shape: f32[2,256], index: 0, kind: input, shape index: {}]
  %s1 = inlined_call_operand.vmem [shape: f32[1,256], index: 1, kind: input, shape index: {}]
  %s2 = inlined_call_operand.hbm [shape: f32[2,256], index: 2, kind: output, shape index: {}]
  %s3 = sld [smem:[#allocation0]]
  $region22: #{tpu_custom_call.1} parent=0
    _
  %s5 = ssub.s32 1, %s3
  %s6 = scalar_select 0, %s5, %s3
  $region1: #{tpu_custom_call.1} parent=0
    #allocation2 [shape = 'u8[2048]{0}', space=vmem, size = 0x800, scoped, tag = 'input window, operand 0, single buffered']
    #allocation3 [shape = 's32[1]{0}', space=sflag, size = 0x4, scoped, tag = 'scoped memory for tpu_custom_call.1']
    #allocation4 [shape = 's32[1]{0}', space=sflag, size = 0x4, scoped, tag = 'scoped memory for tpu_custom_call.1']
    #allocation5 [shape = 'u8[2048]{0}', space=vmem, size = 0x800, scoped, tag = 'output window, operand 0, single buffered']
    %7 = vsyncpa [#allocation3], 0
    %8 = vsyncpa [#allocation4], 0
    // Predicated region
    $region2: #{tpu_custom_call.1} parent=1 // pred_check
      _
    $region3: #{tpu_custom_call.1} parent=1 // pred_check_branch
      %10 = sbr.rel (0) target = $region5
    $region4: #{tpu_custom_call.1} parent=1 // pred_region
      %s12 = ssub.s32 64, 64
      %13 = vsyncadd [#allocation3], %s12
      %s15 = sshll.u32 [#allocation2], 4
      %s16 = int_to_ptr.vmem [resolvable:$true] %s15
      %18 = dma.hbm_to_vmem [thread:$0]  %s0, 64, %s16, [#allocation3]
    $region5: #{tpu_custom_call.1} parent=1 // pred_fallthru
      _
    // Predicated region
    $region6: #{tpu_custom_call.1} parent=1 // pred_check
      _
    $region7: #{tpu_custom_call.1} parent=1 // pred_check_branch
      %20 = sbr.rel (0) target = $region9
    $region8: #{tpu_custom_call.1} parent=1 // pred_region
      _
    $region9: #{tpu_custom_call.1} parent=1 // pred_fallthru
      _
    // Predicated region
    $region10: #{tpu_custom_call.1} parent=1 // pred_check
      _
    $region11: #{tpu_custom_call.1} parent=1 // pred_check_branch
      %22 = sbr.rel (0) target = $region13
    $region12: #{tpu_custom_call.1} parent=1 // pred_region
      %23 = dma.done [#allocation3], 64
    $region13: #{tpu_custom_call.1} parent=1 // pred_fallthru
      _
    %v24 = vld [vmem:[#allocation2] sm:$0xf]
    %v25 = vld [vmem:[%s1] sm:$0x3]
    %v27 = vlaneseq
    %v28 = vshrl.u32 %v27, 7
    %v29 = vsub.s32 0, %v28
    %v30 = vrot.slane %v25, %v29
    %v31 = vlaneseq
    %v32 = vshrl.u32 %v31, 7
    %v33 = vsub.s32 1, %v32
    %v34 = vrot.slane %v25, %v33
    %v35 = vcombine.low %v30, %v34
    %v37 = vunpack.c.l.s4 1983009808
    %v38 = vunpack.c.0.s8 %v37
    %v39 = vlaneseq
    %v40 = vshrl.u32 %v39, 7
    %v41 = vsub.s32 %v38, %v40
    %v42 = vrot.slane %v35, %v41
    %v44 = vadd.f32 %v24, %v42
    %45 = vst [vmem:[#allocation5] sm:$0xf] %v44
    // Predicated region
    $region14: #{tpu_custom_call.1} parent=1 // pred_check
      _
    $region15: #{tpu_custom_call.1} parent=1 // pred_check_branch
      %47 = sbr.rel (0) target = $region17
    $region16: #{tpu_custom_call.1} parent=1 // pred_region
      %s49 = ssub.s32 64, 64
      %50 = vsyncadd [#allocation4], %s49
      %s52 = sshll.u32 [#allocation5], 4
      %s53 = int_to_ptr.vmem [resolvable:$true] %s52
      %55 = dma.vmem_to_hbm [thread:$0]  %s53, 64, %s2, [#allocation4]
    $region17: #{tpu_custom_call.1} parent=1 // pred_fallthru
      _
    // Predicated region
    $region18: #{tpu_custom_call.1} parent=1 // pred_check
      _
    $region19: #{tpu_custom_call.1} parent=1 // pred_check_branch
      %57 = sbr.rel (0) target = $region21
    $region20: #{tpu_custom_call.1} parent=1 // pred_region
      %58 = dma.done [#allocation4], 64
    $region21: #{tpu_custom_call.1} parent=1 // pred_fallthru
      _
    %59 = vsyncpa [#allocation3], 1
    %60 = vsyncpa [#allocation4], 1

</llo_original>
